<compile_context>
chip_gen: v7x
topology: tpu7x:2x2x1
jax: 0.10.0
libtpu: 0.0.40
codegen_flags: <defaults>
</compile_context>

<pallas_src>
import jax
import jax.numpy as jnp
from jax.experimental import pallas as pl
from jax.experimental.pallas import tpu as pltpu


def _round_up(x, m):
    return ((x + m - 1) // m) * m


def _vmem_budget_bytes():
    """Generation-aware usable scoped-VMEM budget (capacity minus headroom)."""
    cap = 64 << 20  # conservative fallback (valid on every generation incl. v7x)
    try:
        cap = int(pltpu.get_tpu_info().vmem_capacity_bytes)
    except Exception:
        pass
    return max(32 << 20, cap - (8 << 20))  # headroom for compiler scratch / sems


# --------------------------------------------------------------------------
# Kernels
# --------------------------------------------------------------------------
def _fused_kernel(x_ref, w1_ref, w2_ref, b_ref, o_ref):
    """Resident-weights path: y = ((x @ W1)_bf16 @ W2) + b_fused, per batch tile."""
    h = jnp.dot(x_ref[...], w1_ref[...], preferred_element_type=jnp.float32)
    y = jnp.dot(h.astype(jnp.bfloat16), w2_ref[...],
                preferred_element_type=jnp.float32)
    o_ref[...] = (y + b_ref[...]).astype(o_ref.dtype)


def _fused_kernel_mtiled(x_ref, w1_ref, w2_ref, b_ref, o_ref, acc_ref):
    """Tiled-M fallback: accumulate partial second matmul over the mid dim."""
    m = pl.program_id(1)

    @pl.when(m == 0)
    def _():
        acc_ref[...] = jnp.zeros_like(acc_ref)

    h = jnp.dot(x_ref[...], w1_ref[...], preferred_element_type=jnp.float32)
    acc_ref[...] += jnp.dot(h.astype(jnp.bfloat16), w2_ref[...],
                            preferred_element_type=jnp.float32)

    @pl.when(m == pl.num_programs(1) - 1)
    def _():
        o_ref[...] = (acc_ref[...] + b_ref[...]).astype(o_ref.dtype)


# --------------------------------------------------------------------------
# One-time parameter preparation (init time, NOT per forward call)
# --------------------------------------------------------------------------
def prepare_add_layer_params(w1, b1, w2, b2):
    """Pad feature dims to lane multiples (128), cast weights to bf16 once,
    and fold b1 into a fused second bias  b_fused = b1 @ W2 + b2."""
    H, M = w1.shape
    M2, C = w2.shape
    assert M == M2
    b1 = jnp.asarray(b1, jnp.float32).reshape(1, M)
    b2 = jnp.asarray(b2, jnp.float32).reshape(1, C)

    Hp, Mp, Cp = (_round_up(d, 128) for d in (H, M, C))
    w1p = jnp.zeros((Hp, Mp), jnp.bfloat16).at[:H, :M].set(
        jnp.asarray(w1).astype(jnp.bfloat16))
    w2p = jnp.zeros((Mp, Cp), jnp.bfloat16).at[:M, :C].set(
        jnp.asarray(w2).astype(jnp.bfloat16))
    b_fused = jnp.dot(b1, jnp.asarray(w2, jnp.float32),
                      preferred_element_type=jnp.float32) + b2
    bp = jnp.zeros((1, Cp), jnp.float32).at[:, :C].set(b_fused)
    return {"w1": w1p, "w2": w2p, "b": bp, "dims": (H, M, C)}


# --------------------------------------------------------------------------
# Forward wrapper
# --------------------------------------------------------------------------
def add_layer_forward(x, params, *, tb=None, out_dtype=jnp.float32,
                      force_tm=None):
    """Fused forward: extra_layer(model(x)) with pre-prepared params.

    x      : (B, H) float32 or bfloat16
    params : dict from prepare_add_layer_params
    tb     : optional batch tile override (rounded up to a multiple of 16)
    force_tm: testing hook — force the tiled-M fallback with this M tile.
    """
    w1p, w2p, bp = params["w1"], params["w2"], params["b"]
    H, M, C = params["dims"]
    Hp, Mp = w1p.shape
    Mp2, Cp = w2p.shape
    B, Hx = x.shape
    assert Hx == H and Mp == Mp2

    out_bytes = jnp.dtype(out_dtype).itemsize
    budget = _vmem_budget_bytes()

    # ---- batch tile: >=16 (bf16 sublane pack), prefer 128-multiples, >=2 grid
    #      steps when B allows (v7x megacore), sized to the VMEM budget. ----
    B16 = _round_up(B, 16)
    if tb is not None:
        TB = min(_round_up(max(tb, 16), 16), B16)
    else:
        TB = min(512, B16)
        if B16 >= 32:
            TB = min(TB, _round_up(pl.cdiv(B16, 2), 16))  # at least 2 tiles
        if TB >= 128:
            TB = (TB // 128) * 128                        # MXU-natural multiple

    # ---- VMEM footprint model (every input block double-buffered by default
    #      BlockSpec pipelining; includes the f32 intermediate h). ----
    def _tile_bytes(TB_, TM_):
        return (2 * TB_ * Hp * 2                 # x tile (bf16, double-buffered)
                + 2 * TB_ * Cp * out_bytes       # out tile (double-buffered)
                + TB_ * TM_ * 6                  # h: f32 + bf16 temporaries
                + TB_ * Cp * 4)                  # y / accumulator (f32)

    w_resident = 2 * (Hp * Mp * 2 + Mp * Cp * 2 + Cp * 4)
    use_resident = (force_tm is None
                    and w_resident + _tile_bytes(16, Mp) <= budget)

    if use_resident:
        TM = Mp
        while TB > 16 and w_resident + _tile_bytes(TB, Mp) > budget:
            TB = _round_up(TB // 2, 16)
        needed = w_resident + _tile_bytes(TB, Mp)
    else:
        def _wtile(TM_):
            return 2 * (Hp * TM_ * 2 + TM_ * Cp * 2 + Cp * 4)

        if force_tm is not None:
            TM = min(_round_up(force_tm, 128), Mp)
            assert Mp % TM == 0, "force_tm must evenly divide the padded mid dim"
        else:
            TM = 128
            for t in range(min(Mp, 512), 0, -128):
                if Mp % t == 0 and _wtile(t) + _tile_bytes(TB, t) <= budget:
                    TM = t
                    break
        while TB > 16 and _wtile(TM) + _tile_bytes(TB, TM) > budget:
            TB = _round_up(TB // 2, 16)
        needed = _wtile(TM) + _tile_bytes(TB, TM)

    Bp = _round_up(B, TB)
    n_b = Bp // TB

    # ---- x: skip the pad/copy pass when already aligned ----
    if Hp == H and Bp == B:
        xk = x if x.dtype == jnp.bfloat16 else x.astype(jnp.bfloat16)
    else:
        xk = jnp.zeros((Bp, Hp), jnp.bfloat16).at[:B, :H].set(
            x.astype(jnp.bfloat16))

    cost = pl.CostEstimate(
        flops=2 * Bp * (Hp * Mp + Mp * Cp),
        transcendentals=0,
        bytes_accessed=(xk.size * 2 + w1p.size * 2 + w2p.size * 2
                        + bp.size * 4 + Bp * Cp * out_bytes),
    )
    vmem_limit = int(min(budget, max(32 << 20, needed + (4 << 20))))

    if use_resident:
        out_p = pl.pallas_call(
            _fused_kernel,
            out_shape=jax.ShapeDtypeStruct((Bp, Cp), out_dtype),
            grid_spec=pltpu.PrefetchScalarGridSpec(
                num_scalar_prefetch=0,
                grid=(n_b,),
                in_specs=[
                    pl.BlockSpec((TB, Hp), lambda i: (i, 0)),   # x: batch-tiled
                    pl.BlockSpec((Hp, Mp), lambda i: (0, 0)),   # W1: VMEM-resident
                    pl.BlockSpec((Mp, Cp), lambda i: (0, 0)),   # W2: VMEM-resident
                    pl.BlockSpec((1, Cp), lambda i: (0, 0)),    # fused bias
                ],
                out_specs=pl.BlockSpec((TB, Cp), lambda i: (i, 0)),
            ),
            compiler_params=pltpu.CompilerParams(
                dimension_semantics=("parallel",),
                vmem_limit_bytes=vmem_limit),
            cost_estimate=cost,
        )(xk, w1p, w2p, bp)
    else:
        n_m = Mp // TM
        out_p = pl.pallas_call(
            _fused_kernel_mtiled,
            out_shape=jax.ShapeDtypeStruct((Bp, Cp), out_dtype),
            grid_spec=pltpu.PrefetchScalarGridSpec(
                num_scalar_prefetch=0,
                grid=(n_b, n_m),
                in_specs=[
                    pl.BlockSpec((TB, Hp), lambda i, m: (i, 0)),
                    pl.BlockSpec((Hp, TM), lambda i, m: (0, m)),
                    pl.BlockSpec((TM, Cp), lambda i, m: (m, 0)),
                    pl.BlockSpec((1, Cp), lambda i, m: (0, 0)),
                ],
                out_specs=pl.BlockSpec((TB, Cp), lambda i, m: (i, 0)),
                scratch_shapes=[pltpu.VMEM((TB, Cp), jnp.float32)],
            ),
            compiler_params=pltpu.CompilerParams(
                dimension_semantics=("parallel", "arbitrary"),
                vmem_limit_bytes=vmem_limit),
            cost_estimate=cost,
        )(xk, w1p, w2p, bp)

    if Bp == B and Cp == C:
        return out_p
    return out_p[:B, :C]


# --------------------------------------------------------------------------
# References
# --------------------------------------------------------------------------
def _reference_f32(x, w1, b1, w2, b2):
    return (x @ w1 + b1) @ w2 + b2


def _reference_kernel_path(x, w1, b1, w2, b2):
    """Mirrors the kernel's bf16-operand / f32-accumulate / fused-bias path."""
    bf = jnp.dot(b1.astype(jnp.float32), w2.astype(jnp.float32),
                 preferred_element_type=jnp.float32) + b2
    h = jnp.dot(x.astype(jnp.bfloat16), w1.astype(jnp.bfloat16),
                preferred_element_type=jnp.float32)
    return jnp.dot(h.astype(jnp.bfloat16), w2.astype(jnp.bfloat16),
                   preferred_element_type=jnp.float32) + bf


if __name__ == "__main__":
    key = jax.random.PRNGKey(0)

    def make_case(k, B, H, M, C):
        kx, kw1, kb1, kw2, kb2 = jax.random.split(k, 5)
        x = jax.random.normal(kx, (B, H), jnp.float32)
        w1 = jax.random.normal(kw1, (H, M), jnp.float32) * (1.0 / jnp.sqrt(H))
        b1 = jax.random.normal(kb1, (1, M), jnp.float32) * 0.01
        w2 = jax.random.normal(kw2, (M, C), jnp.float32) * (1.0 / jnp.sqrt(M))
        b2 = jax.random.normal(kb2, (1, C), jnp.float32) * 0.01
        return x, w1, b1, w2, b2

    k1, k2 = jax.random.split(key)

    # Case 1: lane-aligned shapes -> x fast path (no pad copy), 2 batch tiles
    #         of 16 rows each (both v7x TensorCores active on the batch axis).
    x, w1, b1, w2, b2 = make_case(k1, 32, 128, 256, 16)
    params = prepare_add_layer_params(w1, b1, w2, b2)     # one-time prep
    out = jax.block_until_ready(add_layer_forward(x, params))
    assert out.shape == (32, 16)
    assert jnp.allclose(out, _reference_kernel_path(x, w1, b1, w2, b2),
                        atol=2e-3, rtol=2e-3), "mismatch vs kernel-path reference"
    assert jnp.allclose(out, _reference_f32(x, w1, b1, w2, b2),
                        atol=5e-2, rtol=5e-2), "mismatch vs f32 reference"

    # Case 1b: force the tiled-M fallback path (used when resident weights
    #          would not fit VMEM, e.g. huge hidden sizes on v7x).
    out_t = jax.block_until_ready(add_layer_forward(x, params, force_tm=128))
    assert jnp.allclose(out_t, out, atol=2e-3, rtol=2e-3), \
        "tiled-M fallback disagrees with resident path"

    # Case 2: unaligned small shapes -> padded path.
    x2, w1b, b1b, w2b, b2b = make_case(k2, 10, 48, 72, 5)
    params2 = prepare_add_layer_params(w1b, b1b, w2b, b2b)
    out2 = jax.block_until_ready(add_layer_forward(x2, params2))
    assert out2.shape == (10, 5)
    assert jnp.allclose(out2, _reference_kernel_path(x2, w1b, b1b, w2b, b2b),
                        atol=2e-3, rtol=2e-3), "mismatch vs kernel-path reference"
    assert jnp.allclose(out2, _reference_f32(x2, w1b, b1b, w2b, b2b),
                        atol=5e-2, rtol=5e-2), "mismatch vs f32 reference"

    print("KERNEL_OK")
</pallas_src>

<mosaic_0001>
module attributes {stable_mosaic.version = 11 : i64} {
  func.func @_fused_kernel(%arg0: i32, %arg1: memref<16x128xbf16, #tpu.memory_space<vmem>>, %arg2: memref<128x256xbf16, #tpu.memory_space<vmem>>, %arg3: memref<256x128xbf16, #tpu.memory_space<vmem>>, %arg4: memref<1x128xf32, #tpu.memory_space<vmem>>, %arg5: memref<16x128xf32, #tpu.memory_space<vmem>>) attributes {dimension_semantics = [#tpu.dimension_semantics<parallel>], iteration_bounds = array<i64: 2>, scalar_prefetch = 0 : i64, scratch_operands = 0 : i64, tpu.core_type = #tpu.core_type<tc>, window_params = [{transform_indices = @transform_0, window_bounds = array<i64: 16, 128>}, {pipeline_mode = #tpu.pipeline_mode<synchronous>, transform_indices = @transform_1, window_bounds = array<i64: 128, 256>}, {pipeline_mode = #tpu.pipeline_mode<synchronous>, transform_indices = @transform_2, window_bounds = array<i64: 256, 128>}, {pipeline_mode = #tpu.pipeline_mode<synchronous>, transform_indices = @transform_3, window_bounds = array<i64: 1, 128>}, {transform_indices = @transform_4, window_bounds = array<i64: 16, 128>}]} {
    %c0 = arith.constant 0 : index
    %c0_0 = arith.constant 0 : index
    %0 = vector.load %arg1[%c0, %c0_0] : memref<16x128xbf16, #tpu.memory_space<vmem>>, vector<16x128xbf16>
    %c0_1 = arith.constant 0 : index
    %c0_2 = arith.constant 0 : index
    %1 = vector.load %arg2[%c0_1, %c0_2] : memref<128x256xbf16, #tpu.memory_space<vmem>>, vector<128x256xbf16>
    %cst = arith.constant dense<0.000000e+00> : vector<16x256xf32>
    %2 = tpu.matmul %0, %1, %cst {dimension_numbers = #tpu.dot_dimension_numbers<[1], [0], [0], [1], [0, 0, 1, 1], [], []>} : vector<16x128xbf16>, vector<128x256xbf16>, vector<16x256xf32> -> vector<16x256xf32>
    %3 = arith.truncf %2 : vector<16x256xf32> to vector<16x256xbf16>
    %c0_3 = arith.constant 0 : index
    %c0_4 = arith.constant 0 : index
    %4 = vector.load %arg3[%c0_3, %c0_4] : memref<256x128xbf16, #tpu.memory_space<vmem>>, vector<256x128xbf16>
    %cst_5 = arith.constant dense<0.000000e+00> : vector<16x128xf32>
    %5 = tpu.matmul %3, %4, %cst_5 {dimension_numbers = #tpu.dot_dimension_numbers<[1], [0], [0], [1], [0, 0, 1, 1], [], []>} : vector<16x256xbf16>, vector<256x128xbf16>, vector<16x128xf32> -> vector<16x128xf32>
    %c0_6 = arith.constant 0 : index
    %c0_7 = arith.constant 0 : index
    %6 = vector.load %arg4[%c0_6, %c0_7] : memref<1x128xf32, #tpu.memory_space<vmem>>, vector<1x128xf32>
    %7 = vector.broadcast %6 : vector<1x128xf32> to vector<16x128xf32>
    %8 = arith.addf %5, %7 : vector<16x128xf32>
    %c0_8 = arith.constant 0 : index
    %c0_9 = arith.constant 0 : index
    %9 = vector.load %arg5[%c0_8, %c0_9] : memref<16x128xf32, #tpu.memory_space<vmem>>, vector<16x128xf32>
    tpu.vector_store %arg5[%c0_8, %c0_9], %8 {strides = array<i32>} : memref<16x128xf32, #tpu.memory_space<vmem>>, vector<16x128xf32>,
    return
  }
  func.func @transform_0(%arg0: i32) -> (i32, i32) {
    %c0_i32 = arith.constant 0 : i32
    %c0_i32_0 = arith.constant 0 : i32
    return %arg0, %c0_i32 : i32, i32
  }
  func.func @transform_1(%arg0: i32) -> (i32, i32) {
    %c0_i32 = arith.constant 0 : i32
    %c0_i32_0 = arith.constant 0 : i32
    %c0_i32_1 = arith.constant 0 : i32
    return %c0_i32, %c0_i32_0 : i32, i32
  }
  func.func @transform_2(%arg0: i32) -> (i32, i32) {
    %c0_i32 = arith.constant 0 : i32
    %c0_i32_0 = arith.constant 0 : i32
    %c0_i32_1 = arith.constant 0 : i32
    return %c0_i32, %c0_i32_0 : i32, i32
  }
  func.func @transform_3(%arg0: i32) -> (i32, i32) {
    %c0_i32 = arith.constant 0 : i32
    %c0_i32_0 = arith.constant 0 : i32
    %c0_i32_1 = arith.constant 0 : i32
    return %c0_i32, %c0_i32_0 : i32, i32
  }
  func.func @transform_4(%arg0: i32) -> (i32, i32) {
    %c0_i32 = arith.constant 0 : i32
    %c0_i32_0 = arith.constant 0 : i32
    return %arg0, %c0_i32 : i32, i32
  }
}

</mosaic_0001>

<llo_original>
// kernel: tpu_custom_call.1
$region0: #{tpu_custom_call.1}
  #allocation0 [shape = 'u32[]', space=smem, size = 0x4, offset = 0x4, fixed_abs, tag = 'smem constant byte address 0x4 - core index']
  #allocation1 [shape = 'u32[144,128]{1,0:T(1,128)}', space=vmem, size = 0x12000, scoped, tag = 'internal scratch']
  %s0 = inlined_call_operand.hbm [shape: bf16[32,128], index: 0, kind: input, shape index: {}]
  %s1 = inlined_call_operand.hbm [shape: bf16[128,256], index: 1, kind: input, shape index: {}]
  %s2 = inlined_call_operand.hbm [shape: bf16[256,128], index: 2, kind: input, shape index: {}]
  %s3 = inlined_call_operand.vmem [shape: f32[1,128], index: 3, kind: input, shape index: {}]
  %s4 = inlined_call_operand.hbm [shape: f32[32,128], index: 4, kind: output, shape index: {}]
  %s5 = sld [smem:[#allocation0]]
  $region61: #{tpu_custom_call.1} parent=0
    _
  %s7 = ssub.s32 1, %s5
  %s8 = scalar_select 0, %s7, %s5
  $region1: #{tpu_custom_call.1} parent=0
    #allocation2 [shape = 'u8[8192]{0}', space=vmem, size = 0x2000, scoped, tag = 'input window, operand 0']
    #allocation3 [shape = 's32[2]{0}', space=sflag, size = 0x8, scoped, tag = 'scoped memory for tpu_custom_call.1']
    #allocation4 [shape = 's32[2]{0}', space=sflag, size = 0x8, scoped, tag = 'scoped memory for tpu_custom_call.1']
    #allocation5 [shape = 'u8[65536]{0}', space=vmem, size = 0x10000, scoped, tag = 'input window, operand 1, single buffered']
    #allocation6 [shape = 's32[1]{0}', space=sflag, size = 0x4, scoped, tag = 'scoped memory for tpu_custom_call.1']
    #allocation7 [shape = 'u8[65536]{0}', space=vmem, size = 0x10000, scoped, tag = 'input window, operand 2, single buffered']
    #allocation8 [shape = 'u8[16384]{0}', space=vmem, size = 0x4000, scoped, tag = 'output window, operand 0']
    %9 = vsyncpa [#allocation3], 0
    %s10 = scalar_lea.sflag [#allocation3], 1
    %11 = vsyncpa %s10, 0
    %12 = vsyncpa [#allocation6], 0
    %13 = vsyncpa [#allocation4], 0
    %s14 = scalar_lea.sflag [#allocation4], 1
    %15 = vsyncpa %s14, 0
    loop: start=0, step=1, limit=4
    $region2: #{tpu_custom_call.1} parent=1 // loop_pre_header
      _
    $region3: #{tpu_custom_call.1} parent=1 // loop_header
      %s17 = sphi 0, %s21
      %p18 = scmp.ge.s32.totalorder %s17, 4
      %s27 = sphi 0, %s29
      %s30 = sphi 0, %s27
      %s31 = sphi 0, %s30
      %s47 = sphi 0, %s31
      %s51 = sphi 0, %s51
      %s53 = sphi 0, %s51
      %s54 = sphi 0, %s53
      %s68 = sphi 0, %s54
      %s72 = sphi 0, %s72
      %s74 = sphi 0, %s72
      %s75 = sphi 0, %s74
      %s89 = sphi 0, %s75
      %s93 = sphi 0, %s93
      %s95 = sphi 0, %s93
      %s96 = sphi 0, %s95
      %s110 = sphi 0, %s96
      %s116 = sphi 0, %s118
      %s119 = sphi 0, %s116
      %s120 = sphi 0, %s119
      %s136 = sphi 0, %s120
    $region4: #{tpu_custom_call.1} parent=1 // loop_header_branch
      %20 = sbr.rel (%p18) target = $region8
    $region5: #{tpu_custom_call.1} parent=1 // loop_body
      %s22 = ssub.s32 %s17, 1
      %s23 = ssub.s32 %s17, 2
      %s24 = sadd.s32 %s17, 1
      %s25 = ssub.s32 %s17, %s24
      %p26 = scmp.eq.s32.totalorder %s25, 0
      %s28 = sadd.s32 %s27, 1
      %s29 = scalar_select %p26, %s27, %s28
      %p32 = pneg %p26
      %p33 = scmp.eq.s32.totalorder %s17, 1
      %p34 = por %p32, %p33
      %p35 = scmp.ne.s32.totalorder %s27, %s30
      %p36 = scmp.eq.s32.totalorder %s17, 0
      %p37 = por %p35, %p36
      %p38 = scmp.ne.s32.totalorder %s27, %s30
      %p39 = scmp.eq.s32.totalorder %s22, 1
      %p40 = por %p38, %p39
      %p41 = scmp.ne.s32.totalorder %s30, %s31
      %p42 = scmp.eq.s32.totalorder %s22, 0
      %p43 = por %p41, %p42
      %p44 = scmp.ne.s32.totalorder %s30, %s31
      %p45 = scmp.eq.s32.totalorder %s23, 1
      %p46 = por %p44, %p45
      %p48 = scmp.ne.s32.totalorder %s31, %s47
      %p49 = scmp.eq.s32.totalorder %s23, 0
      %p50 = por %p48, %p49
      %s52 = sadd.s32 %s51, 1
      %p55 = scmp.eq.s32.totalorder %s17, 1
      %p56 = scmp.ne.s32.totalorder %s51, %s53
      %p57 = scmp.eq.s32.totalorder %s17, 0
      %p58 = por %p56, %p57
      %p59 = scmp.ne.s32.totalorder %s51, %s53
      %p60 = scmp.eq.s32.totalorder %s22, 1
      %p61 = por %p59, %p60
      %p62 = scmp.ne.s32.totalorder %s53, %s54
      %p63 = scmp.eq.s32.totalorder %s22, 0
      %p64 = por %p62, %p63
      %p65 = scmp.ne.s32.totalorder %s53, %s54
      %p66 = scmp.eq.s32.totalorder %s23, 1
      %p67 = por %p65, %p66
      %p69 = scmp.ne.s32.totalorder %s54, %s68
      %p70 = scmp.eq.s32.totalorder %s23, 0
      %p71 = por %p69, %p70
      %s73 = sadd.s32 %s72, 1
      %p76 = scmp.eq.s32.totalorder %s17, 1
      %p77 = scmp.ne.s32.totalorder %s72, %s74
      %p78 = scmp.eq.s32.totalorder %s17, 0
      %p79 = por %p77, %p78
      %p80 = scmp.ne.s32.totalorder %s72, %s74
      %p81 = scmp.eq.s32.totalorder %s22, 1
      %p82 = por %p80, %p81
      %p83 = scmp.ne.s32.totalorder %s74, %s75
      %p84 = scmp.eq.s32.totalorder %s22, 0
      %p85 = por %p83, %p84
      %p86 = scmp.ne.s32.totalorder %s74, %s75
      %p87 = scmp.eq.s32.totalorder %s23, 1
      %p88 = por %p86, %p87
      %p90 = scmp.ne.s32.totalorder %s75, %s89
      %p91 = scmp.eq.s32.totalorder %s23, 0
      %p92 = por %p90, %p91
      %s94 = sadd.s32 %s93, 1
      %p97 = scmp.eq.s32.totalorder %s17, 1
      %p98 = scmp.ne.s32.totalorder %s93, %s95
      %p99 = scmp.eq.s32.totalorder %s17, 0
      %p100 = por %p98, %p99
      %p101 = scmp.ne.s32.totalorder %s93, %s95
      %p102 = scmp.eq.s32.totalorder %s22, 1
      %p103 = por %p101, %p102
      %p104 = scmp.ne.s32.totalorder %s95, %s96
      %p105 = scmp.eq.s32.totalorder %s22, 0
      %p106 = por %p104, %p105
      %p107 = scmp.ne.s32.totalorder %s95, %s96
      %p108 = scmp.eq.s32.totalorder %s23, 1
      %p109 = por %p107, %p108
      %p111 = scmp.ne.s32.totalorder %s96, %s110
      %p112 = scmp.eq.s32.totalorder %s23, 0
      %p113 = por %p111, %p112
      %s114 = ssub.s32 %s17, %s24
      %p115 = scmp.eq.s32.totalorder %s114, 0
      %s117 = sadd.s32 %s116, 1
      %s118 = scalar_select %p115, %s116, %s117
      %p121 = pneg %p115
      %p122 = scmp.eq.s32.totalorder %s17, 1
      %p123 = por %p121, %p122
      %p124 = scmp.ne.s32.totalorder %s116, %s119
      %p125 = scmp.eq.s32.totalorder %s17, 0
      %p126 = por %p124, %p125
      %p127 = scmp.ne.s32.totalorder %s116, %s119
      %p128 = scmp.eq.s32.totalorder %s22, 1
      %p129 = por %p127, %p128
      %p130 = scmp.ne.s32.totalorder %s119, %s120
      %p131 = scmp.eq.s32.totalorder %s22, 0
      %p132 = por %p130, %p131
      %p133 = scmp.ne.s32.totalorder %s119, %s120
      %p134 = scmp.eq.s32.totalorder %s23, 1
      %p135 = por %p133, %p134
      %p137 = scmp.ne.s32.totalorder %s120, %s136
      %p138 = scmp.eq.s32.totalorder %s23, 0
      %p139 = por %p137, %p138
      %p140 = scmp.le.s32.totalorder 1, %s17
      %p141 = scmp.lt.s32.totalorder %s17, 3
      %p142 = pnand %p140, %p141
      %p143 = pneg %p142
      // Predicated region
      $region9: #{tpu_custom_call.1} parent=5 // pred_check
        _
      $region10: #{tpu_custom_call.1} parent=5 // pred_check_branch
        %145 = sbr.rel (%p142) target = $region12
      $region11: #{tpu_custom_call.1} parent=5 // pred_region
        %s146 = ssub.s32 %s17, 1
        // Predicated region
        $region13: #{tpu_custom_call.1} parent=11 // pred_check
          %p147 = pneg %p64
        $region14: #{tpu_custom_call.1} parent=11 // pred_check_branch
          %149 = sbr.rel (%p147) target = $region16
        $region15: #{tpu_custom_call.1} parent=11 // pred_region
          %s151 = ssub.s32 2048, 2048
          %152 = vsyncadd [#allocation6], %s151
          %s153 = sshll.u32 [#allocation5], 4
          %s154 = int_to_ptr.vmem [resolvable:$true] %s153
          %159 = dma.hbm_to_vmem [thread:$0]  %s1, 2048, %s154, [#allocation6], 128, 128, 8
        $region16: #{tpu_custom_call.1} parent=11 // pred_fallthru
          _
        // Predicated region
        $region17: #{tpu_custom_call.1} parent=11 // pred_check
          %p160 = pneg %p85
        $region18: #{tpu_custom_call.1} parent=11 // pred_check_branch
          %162 = sbr.rel (%p160) target = $region20
        $region19: #{tpu_custom_call.1} parent=11 // pred_region
          %s164 = ssub.s32 2048, 2048
          %165 = vsyncadd [#allocation6], %s164
          %s166 = sshll.u32 [#allocation7], 4
          %s167 = int_to_ptr.vmem [resolvable:$true] %s166
          %172 = dma.hbm_to_vmem [thread:$0]  %s2, 2048, %s167, [#allocation6], 64, 64, 4
        $region20: #{tpu_custom_call.1} parent=11 // pred_fallthru
          _
        // Predicated region
        $region21: #{tpu_custom_call.1} parent=11 // pred_check
          %p173 = pneg %p106
        $region22: #{tpu_custom_call.1} parent=11 // pred_check_branch
          %175 = sbr.rel (%p173) target = $region24
        $region23: #{tpu_custom_call.1} parent=11 // pred_region
          _
        $region24: #{tpu_custom_call.1} parent=11 // pred_fallthru
          _
      $region12: #{tpu_custom_call.1} parent=5 // pred_fallthru
        _
      %p176 = scmp.lt.s32.totalorder %s17, 2
      // Predicated region
      $region25: #{tpu_custom_call.1} parent=5 // pred_check
        %p177 = pneg %p176
      $region26: #{tpu_custom_call.1} parent=5 // pred_check_branch
        %179 = sbr.rel (%p177) target = $region28
      $region27: #{tpu_custom_call.1} parent=5 // pred_region
        // Predicated region
        $region29: #{tpu_custom_call.1} parent=27 // pred_check
          %p180 = pneg %p37
        $region30: #{tpu_custom_call.1} parent=27 // pred_check_branch
          %182 = sbr.rel (%p180) target = $region32
        $region31: #{tpu_custom_call.1} parent=27 // pred_region
          %s183 = sand.u32 %s27, 1
          %s184 = scalar_lea.sflag [#allocation3], %s183
          %s185 = sand.u32 %s27, 1
          %s186 = smul.addr %s185, 8
          %s187 = scalar_lea.vmem [#allocation2], %s186
          %s188 = smul.u32 2, %s17
          %s190 = ssub.s32 128, 128
          %191 = vsyncadd %s184, %s190
          %s192 = smul.addr %s188, 64
          %s193 = scalar_lea.hbm %s0, %s192
          %s194 = sshll.u32 %s187, 4
          %s195 = int_to_ptr.vmem [resolvable:$true] %s194
          %200 = dma.hbm_to_vmem [thread:$0]  %s193, 128, %s195, %s184, 64, 64, 4
        $region32: #{tpu_custom_call.1} parent=27 // pred_fallthru
          _
      $region28: #{tpu_custom_call.1} parent=5 // pred_fallthru
        _
      %p201 = scmp.le.s32.totalorder 1, %s17
      %p202 = scmp.lt.s32.totalorder %s17, 3
      %p203 = pnand %p201, %p202
      %p204 = pneg %p203
      // Predicated region
      $region33: #{tpu_custom_call.1} parent=5 // pred_check
        _
      $region34: #{tpu_custom_call.1} parent=5 // pred_check_branch
        %206 = sbr.rel (%p203) target = $region36
      $region35: #{tpu_custom_call.1} parent=5 // pred_region
        %s207 = ssub.s32 %s17, 1
        %s208 = sand.u32 %s30, 1
        %s209 = scalar_lea.sflag [#allocation3], %s208
        %s210 = sand.u32 %s30, 1
        %s211 = smul.addr %s210, 8
        %s212 = scalar_lea.vmem [#allocation2], %s211
        // Predicated region
        $region37: #{tpu_custom_call.1} parent=35 // pred_check
          %p213 = pneg %p43
        $region38: #{tpu_custom_call.1} parent=35 // pred_check_branch
          %215 = sbr.rel (%p213) target = $region40
        $region39: #{tpu_custom_call.1} parent=35 // pred_region
          %216 = dma.done %s209, 128
        $region40: #{tpu_custom_call.1} parent=35 // pred_fallthru
          _
        // Predicated region
        $region41: #{tpu_custom_call.1} parent=35 // pred_check
          %p217 = pneg %p64
        $region42: #{tpu_custom_call.1} parent=35 // pred_check_branch
          %219 = sbr.rel (%p217) target = $region44
        $region43: #{tpu_custom_call.1} parent=35 // pred_region
          %220 = dma.done [#allocation6], 2048
        $region44: #{tpu_custom_call.1} parent=35 // pred_fallthru
          _
        // Predicated region
        $region45: #{tpu_custom_call.1} parent=35 // pred_check
          %p221 = pneg %p85
        $region46: #{tpu_custom_call.1} parent=35 // pred_check_branch
          %223 = sbr.rel (%p221) target = $region48
        $region47: #{tpu_custom_call.1} parent=35 // pred_region
          %224 = dma.done [#allocation6], 2048
        $region48: #{tpu_custom_call.1} parent=35 // pred_fallthru
          _
        %s225 = sand.u32 %s30, 1
        %s226 = scalar_lea.sflag [#allocation3], %s225
        %s227 = sand.u32 %s30, 1
        %s228 = smul.addr %s227, 8
        %s229 = scalar_lea.vmem [#allocation2], %s228
        %p230 = pneg %p43
        %p231 = pneg %p40
        %p232 = pneg %p64
        %p233 = pneg %p61
        %p234 = pneg %p85
        %p235 = pneg %p82
        %p236 = pneg %p106
        %p237 = pneg %p103
        %p238 = pneg %p132
        %p239 = pneg %p129
        %s240 = sand.u32 %s119, 1
        %s241 = scalar_lea.sflag [#allocation4], %s240
        %s242 = sand.u32 %s119, 1
        %s243 = smul.addr %s242, 16
        %s244 = scalar_lea.vmem [#allocation8], %s243
        %s245 = smul.u32 2, %s22
        %s246 = smul.u32 2, %s22
        %v248 = vld [vmem:[%s212] sm:$0xf]
        %v249 = vld [vmem:[%s212 + $0x4] sm:$0xf]
        %v250 = vld [vmem:[#allocation5] sm:$0xff]
        %v251 = vld [vmem:[#allocation5 + $0x8] sm:$0xff]
        %v252 = vld [vmem:[#allocation5 + $0x10] sm:$0xff]
        %v253 = vld [vmem:[#allocation5 + $0x18] sm:$0xff]
        %v254 = vld [vmem:[#allocation5 + $0x20] sm:$0xff]
        %v255 = vld [vmem:[#allocation5 + $0x28] sm:$0xff]
        %v256 = vld [vmem:[#allocation5 + $0x30] sm:$0xff]
        %v257 = vld [vmem:[#allocation5 + $0x38] sm:$0xff]
        %v258 = vld [vmem:[#allocation5 + $0x40] sm:$0xff]
        %v259 = vld [vmem:[#allocation5 + $0x48] sm:$0xff]
        %v260 = vld [vmem:[#allocation5 + $0x50] sm:$0xff]
        %v261 = vld [vmem:[#allocation5 + $0x58] sm:$0xff]
        %v262 = vld [vmem:[#allocation5 + $0x60] sm:$0xff]
        %v263 = vld [vmem:[#allocation5 + $0x68] sm:$0xff]
        %v264 = vld [vmem:[#allocation5 + $0x70] sm:$0xff]
        %v265 = vld [vmem:[#allocation5 + $0x78] sm:$0xff]
        %v268 = vunpack.c.l.b16 %v248
        %v269 = vunpack.c.l.b16 %v249
        %v270 = vpack.c.b16 %v269, %v268
        %v288 = vunpack.c.l.b16 %v250
        %v289 = vunpack.c.h.b16 %v250
        %v290 = vunpack.c.l.b16 %v251
        %v291 = vunpack.c.h.b16 %v251
        %v292 = vunpack.c.l.b16 %v252
        %v293 = vunpack.c.h.b16 %v252
        %v294 = vunpack.c.l.b16 %v253
        %v295 = vunpack.c.h.b16 %v253
        %v296 = vunpack.c.l.b16 %v254
        %v297 = vunpack.c.h.b16 %v254
        %v298 = vunpack.c.l.b16 %v255
        %v299 = vunpack.c.h.b16 %v255
        %v300 = vunpack.c.l.b16 %v256
        %v301 = vunpack.c.h.b16 %v256
        %v302 = vunpack.c.l.b16 %v257
        %v303 = vunpack.c.h.b16 %v257
        %v304 = vunpack.c.l.b16 %v258
        %v305 = vunpack.c.h.b16 %v258
        %v306 = vunpack.c.l.b16 %v259
        %v307 = vunpack.c.h.b16 %v259
        %v308 = vunpack.c.l.b16 %v260
        %v309 = vunpack.c.h.b16 %v260
        %v310 = vunpack.c.l.b16 %v261
        %v311 = vunpack.c.h.b16 %v261
        %v312 = vunpack.c.l.b16 %v262
        %v313 = vunpack.c.h.b16 %v262
        %v314 = vunpack.c.l.b16 %v263
        %v315 = vunpack.c.h.b16 %v263
        %v316 = vunpack.c.l.b16 %v264
        %v317 = vunpack.c.h.b16 %v264
        %v318 = vunpack.c.l.b16 %v265
        %v319 = vunpack.c.h.b16 %v265
        %v320 = vpack.c.b16 %v290, %v288
        %v321 = vpack.c.b16 %v291, %v289
        %v322 = vpack.c.b16 %v294, %v292
        %v323 = vpack.c.b16 %v295, %v293
        %v324 = vpack.c.b16 %v298, %v296
        %v325 = vpack.c.b16 %v299, %v297
        %v326 = vpack.c.b16 %v302, %v300
        %v327 = vpack.c.b16 %v303, %v301
        %v328 = vpack.c.b16 %v306, %v304
        %v329 = vpack.c.b16 %v307, %v305
        %v330 = vpack.c.b16 %v310, %v308
        %v331 = vpack.c.b16 %v311, %v309
        %v332 = vpack.c.b16 %v314, %v312
        %v333 = vpack.c.b16 %v315, %v313
        %v334 = vpack.c.b16 %v318, %v316
        %v335 = vpack.c.b16 %v319, %v317
        %352 = vmatprep.subr.bf16.mxu0 %v321
        %353 = vmatpush1.bf16.msra.mxu0 %v320
        %354 = vmatprep.subr.bf16.mxu0 %v323
        %355 = vmatpush1.bf16.msra.mxu0 %v322
        %356 = vmatprep.subr.bf16.mxu0 %v325
        %357 = vmatpush1.bf16.msra.mxu0 %v324
        %358 = vmatprep.subr.bf16.mxu0 %v327
        %359 = vmatpush1.bf16.msra.mxu0 %v326
        %360 = vmatprep.subr.bf16.mxu0 %v329
        %361 = vmatpush1.bf16.msra.mxu0 %v328
        %362 = vmatprep.subr.bf16.mxu0 %v331
        %363 = vmatpush1.bf16.msra.mxu0 %v330
        %364 = vmatprep.subr.bf16.mxu0 %v333
        %365 = vmatpush1.bf16.msra.mxu0 %v332
        %366 = vmatprep.subr.bf16.mxu0 %v335
        %367 = vmatpush1.bf16.msra.mxu0 %v334
        %368 = vmatprep.subr.bf16.mxu0 0
        %369 = vmatpush1.bf16.msra.mxu0 0
        %370 = vmatprep.subr.bf16.mxu0 0
        %371 = vmatpush1.bf16.msra.mxu0 0
        %372 = vmatprep.subr.bf16.mxu0 0
        %373 = vmatpush1.bf16.msra.mxu0 0
        %374 = vmatprep.subr.bf16.mxu0 0
        %375 = vmatpush1.bf16.msra.mxu0 0
        %376 = vmatprep.subr.bf16.mxu0 0
        %377 = vmatpush1.bf16.msra.mxu0 0
        %378 = vmatprep.subr.bf16.mxu0 0
        %379 = vmatpush1.bf16.msra.mxu0 0
        %380 = vmatprep.subr.bf16.mxu0 0
        %381 = vmatpush1.bf16.msra.mxu0 0
        %382 = vmatprep.subr.bf16.mxu0 0
        %383 = vmatpush1.bf16.msra.mxu0 0
        %384 = vmatprep.mubr.bf16.mxu0 0
        %385 = vmatmul.mubr.bf16.gmra.mrb[0].mxu0 %v270
        %v386 = vpop.f32.mrb[0].mxu0
        %v387 = vadd.f32 0.0, %v386
        %v388 = vpop.f32.mrb[0].mxu0
        %v389 = vadd.f32 0.0, %v388
        %v390 = vpop.f32.mrb[0].mxu0
        %v391 = vadd.f32 0.0, %v390
        %v392 = vpop.f32.mrb[0].mxu0
        %v393 = vadd.f32 0.0, %v392
        %394 = vdwg.mxu0
        %v395 = vpack.c.bf16 %v391, %v387
        %v396 = vpack.c.bf16 %v393, %v389
        %v397 = vld [vmem:[#allocation7] sm:$0xf]
        %v398 = vld [vmem:[#allocation7 + $0x4] sm:$0xf]
        %v399 = vld [vmem:[#allocation7 + $0x8] sm:$0xf]
        %v400 = vld [vmem:[#allocation7 + $0xc] sm:$0xf]
        %v401 = vld [vmem:[#allocation7 + $0x10] sm:$0xf]
        %v402 = vld [vmem:[#allocation7 + $0x14] sm:$0xf]
        %v403 = vld [vmem:[#allocation7 + $0x18] sm:$0xf]
        %v404 = vld [vmem:[#allocation7 + $0x1c] sm:$0xf]
        %v405 = vld [vmem:[#allocation7 + $0x20] sm:$0xf]
        %v406 = vld [vmem:[#allocation7 + $0x24] sm:$0xf]
        %v407 = vld [vmem:[#allocation7 + $0x28] sm:$0xf]
        %v408 = vld [vmem:[#allocation7 + $0x2c] sm:$0xf]
        %v409 = vld [vmem:[#allocation7 + $0x30] sm:$0xf]
        %v410 = vld [vmem:[#allocation7 + $0x34] sm:$0xf]
        %v411 = vld [vmem:[#allocation7 + $0x38] sm:$0xf]
        %v412 = vld [vmem:[#allocation7 + $0x3c] sm:$0xf]
        %v413 = vld [vmem:[#allocation7 + $0x40] sm:$0xf]
        %v414 = vld [vmem:[#allocation7 + $0x44] sm:$0xf]
        %v415 = vld [vmem:[#allocation7 + $0x48] sm:$0xf]
        %v416 = vld [vmem:[#allocation7 + $0x4c] sm:$0xf]
        %v417 = vld [vmem:[#allocation7 + $0x50] sm:$0xf]
        %v418 = vld [vmem:[#allocation7 + $0x54] sm:$0xf]
        %v419 = vld [vmem:[#allocation7 + $0x58] sm:$0xf]
        %v420 = vld [vmem:[#allocation7 + $0x5c] sm:$0xf]
        %v421 = vld [vmem:[#allocation7 + $0x60] sm:$0xf]
        %v422 = vld [vmem:[#allocation7 + $0x64] sm:$0xf]
        %v423 = vld [vmem:[#allocation7 + $0x68] sm:$0xf]
        %v424 = vld [vmem:[#allocation7 + $0x6c] sm:$0xf]
        %v425 = vld [vmem:[#allocation7 + $0x70] sm:$0xf]
        %v426 = vld [vmem:[#allocation7 + $0x74] sm:$0xf]
        %v427 = vld [vmem:[#allocation7 + $0x78] sm:$0xf]
        %v428 = vld [vmem:[#allocation7 + $0x7c] sm:$0xf]
        %v429 = vld [vmem:[%s3] sm:$0x1]
        %v431 = vlaneseq
        %v432 = vshrl.u32 %v431, 7
        %v433 = vsub.s32 0, %v432
        %v434 = vrot.slane %v429, %v433
        %v468 = vunpack.c.l.b16 %v397
        %v469 = vunpack.c.l.b16 %v398
        %v470 = vunpack.c.l.b16 %v399
        %v471 = vunpack.c.l.b16 %v400
        %v472 = vunpack.c.l.b16 %v401
        %v473 = vunpack.c.l.b16 %v402
        %v474 = vunpack.c.l.b16 %v403
        %v475 = vunpack.c.l.b16 %v404
        %v476 = vunpack.c.l.b16 %v405
        %v477 = vunpack.c.l.b16 %v406
        %v478 = vunpack.c.l.b16 %v407
        %v479 = vunpack.c.l.b16 %v408
        %v480 = vunpack.c.l.b16 %v409
        %v481 = vunpack.c.l.b16 %v410
        %v482 = vunpack.c.l.b16 %v411
        %v483 = vunpack.c.l.b16 %v412
        %v484 = vunpack.c.l.b16 %v413
        %v485 = vunpack.c.l.b16 %v414
        %v486 = vunpack.c.l.b16 %v415
        %v487 = vunpack.c.l.b16 %v416
        %v488 = vunpack.c.l.b16 %v417
        %v489 = vunpack.c.l.b16 %v418
        %v490 = vunpack.c.l.b16 %v419
        %v491 = vunpack.c.l.b16 %v420
        %v492 = vunpack.c.l.b16 %v421
        %v493 = vunpack.c.l.b16 %v422
        %v494 = vunpack.c.l.b16 %v423
        %v495 = vunpack.c.l.b16 %v424
        %v496 = vunpack.c.l.b16 %v425
        %v497 = vunpack.c.l.b16 %v426
        %v498 = vunpack.c.l.b16 %v427
        %v499 = vunpack.c.l.b16 %v428
        %v500 = vpack.c.b16 %v469, %v468
        %v501 = vpack.c.b16 %v471, %v470
        %v502 = vpack.c.b16 %v473, %v472
        %v503 = vpack.c.b16 %v475, %v474
        %v504 = vpack.c.b16 %v477, %v476
        %v505 = vpack.c.b16 %v479, %v478
        %v506 = vpack.c.b16 %v481, %v480
        %v507 = vpack.c.b16 %v483, %v482
        %v508 = vpack.c.b16 %v485, %v484
        %v509 = vpack.c.b16 %v487, %v486
        %v510 = vpack.c.b16 %v489, %v488
        %v511 = vpack.c.b16 %v491, %v490
        %v512 = vpack.c.b16 %v493, %v492
        %v513 = vpack.c.b16 %v495, %v494
        %v514 = vpack.c.b16 %v497, %v496
        %v515 = vpack.c.b16 %v499, %v498
        %532 = vmatprep.subr.bf16.mxu0 0
        %533 = vmatpush1.bf16.msra.mxu0 %v500
        %534 = vmatprep.subr.bf16.mxu0 0
        %535 = vmatpush1.bf16.msra.mxu0 %v501
        %536 = vmatprep.subr.bf16.mxu0 0
        %537 = vmatpush1.bf16.msra.mxu0 %v502
        %538 = vmatprep.subr.bf16.mxu0 0
        %539 = vmatpush1.bf16.msra.mxu0 %v503
        %540 = vmatprep.subr.bf16.mxu0 0
        %541 = vmatpush1.bf16.msra.mxu0 %v504
        %542 = vmatprep.subr.bf16.mxu0 0
        %543 = vmatpush1.bf16.msra.mxu0 %v505
        %544 = vmatprep.subr.bf16.mxu0 0
        %545 = vmatpush1.bf16.msra.mxu0 %v506
        %546 = vmatprep.subr.bf16.mxu0 0
        %547 = vmatpush1.bf16.msra.mxu0 %v507
        %548 = vmatprep.subr.bf16.mxu0 0
        %549 = vmatpush1.bf16.msra.mxu0 %v508
        %550 = vmatprep.subr.bf16.mxu0 0
        %551 = vmatpush1.bf16.msra.mxu0 %v509
        %552 = vmatprep.subr.bf16.mxu0 0
        %553 = vmatpush1.bf16.msra.mxu0 %v510
        %554 = vmatprep.subr.bf16.mxu0 0
        %555 = vmatpush1.bf16.msra.mxu0 %v511
        %556 = vmatprep.subr.bf16.mxu0 0
        %557 = vmatpush1.bf16.msra.mxu0 %v512
        %558 = vmatprep.subr.bf16.mxu0 0
        %559 = vmatpush1.bf16.msra.mxu0 %v513
        %560 = vmatprep.subr.bf16.mxu0 0
        %561 = vmatpush1.bf16.msra.mxu0 %v514
        %562 = vmatprep.subr.bf16.mxu0 0
        %563 = vmatpush1.bf16.msra.mxu0 %v515
        %564 = vmatprep.mubr.bf16.mxu0 %v396
        %565 = vmatmul.mubr.bf16.gmra.mrb[0].mxu0 %v395
        %v566 = vpop.f32.mrb[0].mxu0
        %v567 = vadd.f32 %v434, %v566
        %v568 = vpop.f32.mrb[0].mxu0
        %v569 = vpop.f32.mrb[0].mxu0
        %v570 = vadd.f32 %v434, %v569
        %v571 = vpop.f32.mrb[0].mxu0
        %572 = vdwg.mxu0
        %573 = vst [vmem:[%s244] sm:$0xff] %v567
        %574 = vst [vmem:[%s244 + $0x8] sm:$0xff] %v570
        %s575 = sand.u32 %s119, 1
        %s576 = scalar_lea.sflag [#allocation4], %s575
        %s577 = sand.u32 %s119, 1
        %s578 = smul.addr %s577, 16
        %s579 = scalar_lea.vmem [#allocation8], %s578
        // Predicated region
        $region49: #{tpu_custom_call.1} parent=35 // pred_check
          %p580 = pneg %p129
        $region50: #{tpu_custom_call.1} parent=35 // pred_check_branch
          %582 = sbr.rel (%p580) target = $region52
        $region51: #{tpu_custom_call.1} parent=35 // pred_region
          %s583 = smul.u32 2, %s22
          %s585 = ssub.s32 256, 256
          %586 = vsyncadd %s576, %s585
          %s587 = smul.addr %s583, 128
          %s588 = scalar_lea.hbm %s4, %s587
          %s589 = sshll.u32 %s579, 4
          %s590 = int_to_ptr.vmem [resolvable:$true] %s589
          %595 = dma.vmem_to_hbm [thread:$0]  %s590, 256, %s588, %s576, 128, 128, 8
        $region52: #{tpu_custom_call.1} parent=35 // pred_fallthru
          _
      $region36: #{tpu_custom_call.1} parent=5 // pred_fallthru
        _
      %p596 = scmp.le.s32.totalorder 2, %s17
      // Predicated region
      $region53: #{tpu_custom_call.1} parent=5 // pred_check
        %p597 = pneg %p596
      $region54: #{tpu_custom_call.1} parent=5 // pred_check_branch
        %599 = sbr.rel (%p597) target = $region56
      $region55: #{tpu_custom_call.1} parent=5 // pred_region
        %s600 = ssub.s32 %s17, 2
        // Predicated region
        $region57: #{tpu_custom_call.1} parent=55 // pred_check
          %p601 = pneg %p135
        $region58: #{tpu_custom_call.1} parent=55 // pred_check_branch
          %603 = sbr.rel (%p601) target = $region60
        $region59: #{tpu_custom_call.1} parent=55 // pred_region
          %s604 = sand.u32 %s120, 1
          %s605 = scalar_lea.sflag [#allocation4], %s604
          %s606 = sand.u32 %s120, 1
          %s607 = smul.addr %s606, 16
          %s608 = scalar_lea.vmem [#allocation8], %s607
          %609 = dma.done %s605, 256
        $region60: #{tpu_custom_call.1} parent=55 // pred_fallthru
          _
      $region56: #{tpu_custom_call.1} parent=5 // pred_fallthru
        _
    $region6: #{tpu_custom_call.1} parent=1 // loop_footer
      %s21 = sadd.s32 1, %s17
    $region7: #{tpu_custom_call.1} parent=1 // loop_footer_branch
      %16 = sbr.rel target = $region3
    $region8: #{tpu_custom_call.1} parent=1 // loop_exit
      _
    %610 = vsyncpa [#allocation3], 1
    %s611 = scalar_lea.sflag [#allocation3], 1
    %612 = vsyncpa %s611, 1
    %613 = vsyncpa [#allocation6], 1
    %614 = vsyncpa [#allocation4], 1
    %s615 = scalar_lea.sflag [#allocation4], 1
    %616 = vsyncpa %s615, 1

</llo_original>
